<compile_context>
chip_gen: v6e
topology: v6e:2x2x1
jax: 0.10.0
libtpu: 0.0.40
codegen_flags: <defaults>
</compile_context>

<pallas_src>
import functools

import jax
import jax.numpy as jnp
from jax import lax
from jax.experimental import pallas as pl
from jax.experimental.pallas import tpu as pltpu

GEM_EPS = 1e-6   # clamp eps used by GeneralizedMeanPooling
BN_EPS = 1e-5    # nn.BatchNorm1d default eps


def _classifier_kernel(chw, p_ref, x_ref, scale_ref, shift_ref, w_ref,
                       bn_ref, cls_ref, acc_ref):
    # chw       : static HW chunk size (divides HW)
    # p_ref     : (1,)           SMEM (scalar prefetch) - GeM power parameter
    # x_ref     : (TN, C, HW)    VMEM - batch tile of the flattened feature map (native dtype)
    # scale_ref : (1, C)         VMEM - folded BN scale  = gamma * rsqrt(var + eps)
    # shift_ref : (1, C)         VMEM - folded BN shift  = beta - mean * scale
    # w_ref     : (C, P_pad)     VMEM - classifier weight, pre-transposed, lane-padded, bf16
    # bn_ref    : (TN, C)        VMEM out - bn_features tile (f32)
    # cls_ref   : (TN, P_pad)    VMEM out - padded cls_score tile (lane-dense store)
    # acc_ref   : (TN, C)        VMEM scratch - f32 spatial-sum accumulator
    p = p_ref[0]
    hw = x_ref.shape[-1]
    n_chunks = hw // chw
    inv_hw = 1.0 / hw

    acc_ref[...] = jnp.zeros_like(acc_ref)

    def _chunk(k):
        off = k * chw
        if chw % 128 == 0:
            off = pl.multiple_of(off, 128)
        xc = x_ref[:, :, pl.ds(off, chw)].astype(jnp.float32)
        return jnp.maximum(xc, GEM_EPS)                 # clamp(min=eps) > 0

    is_p3 = jnp.abs(p - 3.0) < 1e-6

    # --- GeM spatial sum: fast VPU path for the common p == 3 case ---
    @pl.when(is_p3)
    def _():
        def body(k, carry):
            xc = _chunk(k)
            acc_ref[...] += jnp.sum(xc * xc * xc, axis=-1)
            return carry
        lax.fori_loop(0, n_chunks, body, 0)

    # --- general path: x^p via EUP log + exp (x > 0) ---
    @pl.when(jnp.logical_not(is_p3))
    def _():
        def body(k, carry):
            xc = _chunk(k)
            acc_ref[...] += jnp.sum(jnp.exp(p * jnp.log(xc)), axis=-1)
            return carry
        lax.fori_loop(0, n_chunks, body, 0)

    # mean over HW, then ^(1/p)  (pooled > 0 since inputs were clamped to eps)
    pooled = acc_ref[...] * inv_hw                      # (TN, C)
    feats = jnp.exp(jnp.log(pooled) * (1.0 / p))

    # --- BatchNorm1d (inference mode, affine pre-folded) ---
    bn = feats * scale_ref[...] + shift_ref[...]        # (TN,C) * (1,C) + (1,C)
    bn_ref[...] = bn.astype(bn_ref.dtype)

    # --- Linear (no bias): bf16 x bf16 MXU matmul, f32 accumulate ---
    cls_ref[...] = jnp.dot(bn.astype(w_ref.dtype), w_ref[...],
                           preferred_element_type=jnp.float32).astype(cls_ref.dtype)


def _usable_vmem_bytes():
    """Generation-aware usable VMEM (leave headroom for compiler scratch/semaphores)."""
    cap = 64 << 20                                      # conservative default (v7x)
    try:
        info = pltpu.get_tpu_info()
        cap = int(getattr(info, "vmem_capacity_bytes", cap))
    except Exception:
        pass
    return min((cap * 3) // 4, 100 << 20)               # ~48 MiB on v7x, <=100 MiB on v5e/v6e


def _pick_hw_chunk(hw, target=1024):
    """HW chunk for the in-kernel reduction: full HW if small, else the largest
    multiple-of-128 divisor of HW that is <= target (aligned dynamic lane slices)."""
    if hw <= target:
        return hw
    best = 0
    for d in range(128, target + 1, 128):
        if hw % d == 0:
            best = d
    return best if best else hw


def _pick_batch_tile(n, c, hw, chw, p_pad, itemsize, budget_bytes):
    """Largest batch tile (multiple of 8 dividing N) whose footprint fits the budget,
    capped so the grid keeps >= 2 (prefer >= 4) steps once N >= 16."""
    def tile_bytes(tn):
        return (2 * tn * c * hw * itemsize              # double-buffered x stream
                + 3 * tn * c * chw * 4                  # per-chunk f32 temporaries
                + 2 * tn * (c + p_pad) * 4              # double-buffered outputs
                + tn * c * 4)                           # f32 accumulator scratch

    if n % 8 != 0:
        return n                                        # small/odd batch: single batch block
    if n >= 32 and n % 4 == 0:
        cap = n // 4                                    # >= 4 grid steps
    elif n >= 16:
        cap = n // 2                                    # >= 2 grid steps
    else:
        cap = n
    tn = 8
    while (tn * 2 <= cap) and (n % (tn * 2) == 0) and (tile_bytes(tn * 2) <= budget_bytes):
        tn *= 2
    return tn


def classifier_forward(features_map, p, gamma, beta, running_mean, running_var, weight):
    """features_map: (N, C, H, W) NCHW, any float dtype. weight: (pid_num, C) as in nn.Linear."""
    N, C, H, W = features_map.shape
    HW = H * W
    pid_num = weight.shape[0]
    P_pad = pl.cdiv(pid_num, 128) * 128                 # lane-dense classifier output width

    # Metadata-only reshape; keep the HBM-resident tensor in its native dtype.
    x = features_map.reshape(N, C, HW)
    itemsize = jnp.dtype(features_map.dtype).itemsize

    # Fold BN (eval mode) into a single affine.
    scale = (jnp.asarray(gamma, jnp.float32)
             * lax.rsqrt(jnp.asarray(running_var, jnp.float32) + BN_EPS)).reshape(1, C)
    shift = (jnp.asarray(beta, jnp.float32)
             - jnp.asarray(running_mean, jnp.float32) * scale[0]).reshape(1, C)

    # Pre-transpose, zero-pad and bf16-cast the classifier weight -> (C, P_pad) bf16.
    w_t = jnp.asarray(weight, jnp.float32).T                        # (C, pid_num)
    if P_pad != pid_num:
        w_t = jnp.pad(w_t, ((0, 0), (0, P_pad - pid_num)))          # (C, P_pad)
    w_pad = w_t.astype(jnp.bfloat16)

    p_arr = jnp.asarray(p, jnp.float32).reshape(1)

    # VMEM accounting (resident operands counted 2x: BlockSpec double-buffers them).
    usable_vmem = _usable_vmem_bytes()
    resident_bytes = 2 * (C * P_pad * 2 + 2 * C * 4)    # weight(bf16) + BN scale/shift
    slack = 6 << 20
    CHW = _pick_hw_chunk(HW)
    budget = max(usable_vmem - resident_bytes - slack, 4 << 20)
    TN = _pick_batch_tile(N, C, HW, CHW, P_pad, itemsize, budget)
    grid = (N // TN,)

    tile_bytes = (2 * TN * C * HW * itemsize + 3 * TN * C * CHW * 4
                  + 2 * TN * (C + P_pad) * 4 + TN * C * 4)
    vmem_limit = int(max(16 << 20, min(usable_vmem, tile_bytes + resident_bytes + slack)))

    cost = pl.CostEstimate(
        flops=int(2 * N * C * P_pad + 3 * N * C * HW),
        transcendentals=int(2 * N * C * HW + 2 * N * C),    # general-path upper bound
        bytes_accessed=int(N * C * HW * itemsize + C * P_pad * 2
                           + N * C * 4 + N * P_pad * 4 + 4 * C * 4),
    )

    grid_spec = pltpu.PrefetchScalarGridSpec(
        num_scalar_prefetch=1,                           # p -> SMEM before the grid runs
        grid=grid,
        in_specs=[
            pl.BlockSpec((TN, C, HW), lambda i, p_s: (i, 0, 0)),    # batch-tiled feature map
            pl.BlockSpec((1, C), lambda i, p_s: (0, 0)),            # BN scale (resident)
            pl.BlockSpec((1, C), lambda i, p_s: (0, 0)),            # BN shift (resident)
            pl.BlockSpec((C, P_pad), lambda i, p_s: (0, 0)),        # classifier weight (resident)
        ],
        out_specs=[
            pl.BlockSpec((TN, C), lambda i, p_s: (i, 0)),           # bn_features tile
            pl.BlockSpec((TN, P_pad), lambda i, p_s: (i, 0)),       # padded cls_score tile
        ],
        scratch_shapes=[pltpu.VMEM((TN, C), jnp.float32)],          # GeM spatial-sum accumulator
    )

    bn_features, cls_pad = pl.pallas_call(
        functools.partial(_classifier_kernel, CHW),
        grid_spec=grid_spec,
        out_shape=(jax.ShapeDtypeStruct((N, C), jnp.float32),
                   jax.ShapeDtypeStruct((N, P_pad), jnp.float32)),
        compiler_params=pltpu.CompilerParams(
            dimension_semantics=("parallel",),           # batch tiles shard across TCs on v7x
            vmem_limit_bytes=vmem_limit),
        cost_estimate=cost,
    )(p_arr, x, scale, shift, w_pad)

    if P_pad == pid_num:
        return bn_features, cls_pad                      # no pad -> no post-kernel slice copy
    return bn_features, cls_pad[:, :pid_num]


def reference_forward(features_map, p, gamma, beta, running_mean, running_var, weight):
    """Pure-JAX reference for sanity checking (eval-mode BN)."""
    xc = jnp.maximum(features_map.astype(jnp.float32), GEM_EPS)
    pooled = jnp.mean(xc ** p, axis=(2, 3))              # (N, C)
    feats = pooled ** (1.0 / p)
    bn = (feats - running_mean) / jnp.sqrt(running_var + BN_EPS) * gamma + beta
    cls = bn @ weight.T
    return bn, cls


if __name__ == "__main__":
    # Small shapes consistent with the module: c_dim=32 feature channels, pid_num=8.
    N, C, H, W = 2, 32, 16, 16
    pid_num = 8

    key = jax.random.PRNGKey(0)
    k_x, k_w = jax.random.split(key)

    features_map = jax.random.normal(k_x, (N, C, H, W), dtype=jnp.float32)

    # Deterministic parameter init mirroring the PyTorch inits:
    p = jnp.float32(3.0)                                 # GeM power (init norm=3)
    gamma = jnp.ones((C,), jnp.float32)                  # BN weight (kaiming init -> 1)
    beta = jnp.zeros((C,), jnp.float32)                  # BN bias -> 0
    running_mean = jnp.zeros((C,), jnp.float32)
    running_var = jnp.ones((C,), jnp.float32)
    weight = 0.001 * jax.random.normal(k_w, (pid_num, C), dtype=jnp.float32)  # classifier std=0.001

    bn_features, cls_score = classifier_forward(
        features_map, p, gamma, beta, running_mean, running_var, weight)
    jax.block_until_ready((bn_features, cls_score))

    bn_ref, cls_ref = reference_forward(
        features_map, p, gamma, beta, running_mean, running_var, weight)

    assert bn_features.shape == (N, C) and cls_score.shape == (N, pid_num)
    assert jnp.allclose(bn_features, bn_ref, atol=1e-4, rtol=1e-4)
    # bf16 weight / bf16 MXU inputs with f32 accumulate -> slightly looser logits tolerance.
    assert jnp.allclose(cls_score, cls_ref, atol=1e-3, rtol=2e-2)

    # Also exercise the general (non-integer p) EUP path.
    p2 = jnp.float32(2.5)
    bn2, cls2 = classifier_forward(
        features_map, p2, gamma, beta, running_mean, running_var, weight)
    jax.block_until_ready((bn2, cls2))
    bn2_ref, cls2_ref = reference_forward(
        features_map, p2, gamma, beta, running_mean, running_var, weight)
    assert jnp.allclose(bn2, bn2_ref, atol=1e-4, rtol=1e-4)
    assert jnp.allclose(cls2, cls2_ref, atol=1e-3, rtol=2e-2)

    print("KERNEL_OK")
</pallas_src>

<mosaic_0001>
module attributes {stable_mosaic.version = 11 : i64} {
  func.func @_classifier_kernel(%arg0: i32, %arg1: memref<1xf32, #tpu.memory_space<smem>>, %arg2: memref<2x32x256xf32, #tpu.memory_space<vmem>>, %arg3: memref<1x32xf32, #tpu.memory_space<vmem>>, %arg4: memref<1x32xf32, #tpu.memory_space<vmem>>, %arg5: memref<32x128xbf16, #tpu.memory_space<vmem>>, %arg6: memref<2x32xf32, #tpu.memory_space<vmem>>, %arg7: memref<2x128xf32, #tpu.memory_space<vmem>>, %arg8: memref<2x32xf32, #tpu.memory_space<vmem>>) attributes {dimension_semantics = [#tpu.dimension_semantics<parallel>], iteration_bounds = array<i64: 1>, scalar_prefetch = 1 : i64, scratch_operands = 1 : i64, tpu.core_type = #tpu.core_type<tc>, window_params = [{transform_indices = @transform_0, window_bounds = array<i64: 2, 32, 256>}, {pipeline_mode = #tpu.pipeline_mode<synchronous>, transform_indices = @transform_1, window_bounds = array<i64: 1, 32>}, {pipeline_mode = #tpu.pipeline_mode<synchronous>, transform_indices = @transform_2, window_bounds = array<i64: 1, 32>}, {pipeline_mode = #tpu.pipeline_mode<synchronous>, transform_indices = @transform_3, window_bounds = array<i64: 32, 128>}, {transform_indices = @transform_4, window_bounds = array<i64: 2, 32>}, {transform_indices = @transform_5, window_bounds = array<i64: 2, 128>}]} {
    %c0 = arith.constant 0 : index
    %0 = memref.load %arg1[%c0] : memref<1xf32, #tpu.memory_space<smem>>
    %cst = arith.constant 0.000000e+00 : f32
    %1 = vector.broadcast %cst : f32 to vector<2x32xf32>
    %c0_0 = arith.constant 0 : index
    %c0_1 = arith.constant 0 : index
    %2 = vector.load %arg8[%c0_0, %c0_1] : memref<2x32xf32, #tpu.memory_space<vmem>>, vector<2x32xf32>
    tpu.vector_store %arg8[%c0_0, %c0_1], %1 {strides = array<i32>} : memref<2x32xf32, #tpu.memory_space<vmem>>, vector<2x32xf32>,
    %cst_2 = arith.constant 3.000000e+00 : f32
    %3 = arith.subf %0, %cst_2 : f32
    %4 = math.absf %3 : f32
    %cst_3 = arith.constant 9.99999997E-7 : f32
    %5 = arith.cmpf olt, %4, %cst_3 : f32
    %6 = arith.extui %5 : i1 to i32
    %c0_i32 = arith.constant 0 : i32
    %7 = arith.cmpi ne, %6, %c0_i32 : i32
    scf.if %7 {
      %c0_i32_20 = arith.constant 0 : i32
      %c256_i32 = arith.constant 256 : i32
      %30 = arith.muli %c0_i32_20, %c256_i32 : i32
      %31 = tpu.assume_multiple %30, 128 : i32
      %c0_21 = arith.constant 0 : index
      %c0_22 = arith.constant 0 : index
      %32 = arith.index_cast %31 : i32 to index
      %33 = vector.load %arg2[%c0_21, %c0_22, %32] : memref<2x32x256xf32, #tpu.memory_space<vmem>>, vector<2x32x256xf32>
      %cst_23 = arith.constant 9.99999997E-7 : f32
      %34 = vector.broadcast %cst_23 : f32 to vector<2x32x256xf32>
      %35 = arith.maximumf %33, %34 : vector<2x32x256xf32>
      %c0_24 = arith.constant 0 : index
      %c0_25 = arith.constant 0 : index
      %36 = vector.load %arg8[%c0_24, %c0_25] : memref<2x32xf32, #tpu.memory_space<vmem>>, vector<2x32xf32>
      %37 = arith.mulf %35, %35 : vector<2x32x256xf32>
      %38 = arith.mulf %37, %35 : vector<2x32x256xf32>
      %cst_26 = arith.constant dense<0.000000e+00> : vector<2x32xf32>
      %39 = vector.multi_reduction <add>, %38, %cst_26 [2] : vector<2x32x256xf32> to vector<2x32xf32>
      %40 = arith.addf %36, %39 : vector<2x32xf32>
      %c0_27 = arith.constant 0 : index
      %c0_28 = arith.constant 0 : index
      %41 = vector.load %arg8[%c0_27, %c0_28] : memref<2x32xf32, #tpu.memory_space<vmem>>, vector<2x32xf32>
      tpu.vector_store %arg8[%c0_27, %c0_28], %40 {strides = array<i32>} : memref<2x32xf32, #tpu.memory_space<vmem>>, vector<2x32xf32>,
      %c1_i32 = arith.constant 1 : i32
    } else {
    }
    %true = arith.constant true
    %8 = arith.xori %5, %true : i1
    %9 = arith.extui %8 : i1 to i32
    %c0_i32_4 = arith.constant 0 : i32
    %10 = arith.cmpi ne, %9, %c0_i32_4 : i32
    scf.if %10 {
      %c0_i32_20 = arith.constant 0 : i32
      %c256_i32 = arith.constant 256 : i32
      %30 = arith.muli %c0_i32_20, %c256_i32 : i32
      %31 = tpu.assume_multiple %30, 128 : i32
      %c0_21 = arith.constant 0 : index
      %c0_22 = arith.constant 0 : index
      %32 = arith.index_cast %31 : i32 to index
      %33 = vector.load %arg2[%c0_21, %c0_22, %32] : memref<2x32x256xf32, #tpu.memory_space<vmem>>, vector<2x32x256xf32>
      %cst_23 = arith.constant 9.99999997E-7 : f32
      %34 = vector.broadcast %cst_23 : f32 to vector<2x32x256xf32>
      %35 = arith.maximumf %33, %34 : vector<2x32x256xf32>
      %c0_24 = arith.constant 0 : index
      %c0_25 = arith.constant 0 : index
      %36 = vector.load %arg8[%c0_24, %c0_25] : memref<2x32xf32, #tpu.memory_space<vmem>>, vector<2x32xf32>
      %37 = math.log %35 : vector<2x32x256xf32>
      %38 = vector.broadcast %0 : f32 to vector<2x32x256xf32>
      %39 = arith.mulf %38, %37 : vector<2x32x256xf32>
      %40 = math.exp %39 : vector<2x32x256xf32>
      %cst_26 = arith.constant dense<0.000000e+00> : vector<2x32xf32>
      %41 = vector.multi_reduction <add>, %40, %cst_26 [2] : vector<2x32x256xf32> to vector<2x32xf32>
      %42 = arith.addf %36, %41 : vector<2x32xf32>
      %c0_27 = arith.constant 0 : index
      %c0_28 = arith.constant 0 : index
      %43 = vector.load %arg8[%c0_27, %c0_28] : memref<2x32xf32, #tpu.memory_space<vmem>>, vector<2x32xf32>
      tpu.vector_store %arg8[%c0_27, %c0_28], %42 {strides = array<i32>} : memref<2x32xf32, #tpu.memory_space<vmem>>, vector<2x32xf32>,
      %c1_i32 = arith.constant 1 : i32
    } else {
    }
    %c0_5 = arith.constant 0 : index
    %c0_6 = arith.constant 0 : index
    %11 = vector.load %arg8[%c0_5, %c0_6] : memref<2x32xf32, #tpu.memory_space<vmem>>, vector<2x32xf32>
    %cst_7 = arith.constant 3.906250e-03 : f32
    %12 = vector.broadcast %cst_7 : f32 to vector<2x32xf32>
    %13 = arith.mulf %11, %12 : vector<2x32xf32>
    %14 = math.log %13 : vector<2x32xf32>
    %cst_8 = arith.constant 1.000000e+00 : f32
    %15 = arith.divf %cst_8, %0 : f32
    %16 = vector.broadcast %15 : f32 to vector<2x32xf32>
    %17 = arith.mulf %14, %16 : vector<2x32xf32>
    %18 = math.exp %17 : vector<2x32xf32>
    %c0_9 = arith.constant 0 : index
    %c0_10 = arith.constant 0 : index
    %19 = vector.load %arg3[%c0_9, %c0_10] : memref<1x32xf32, #tpu.memory_space<vmem>>, vector<1x32xf32>
    %20 = vector.broadcast %19 : vector<1x32xf32> to vector<2x32xf32>
    %21 = arith.mulf %18, %20 : vector<2x32xf32>
    %c0_11 = arith.constant 0 : index
    %c0_12 = arith.constant 0 : index
    %22 = vector.load %arg4[%c0_11, %c0_12] : memref<1x32xf32, #tpu.memory_space<vmem>>, vector<1x32xf32>
    %23 = vector.broadcast %22 : vector<1x32xf32> to vector<2x32xf32>
    %24 = arith.addf %21, %23 : vector<2x32xf32>
    %c0_13 = arith.constant 0 : index
    %c0_14 = arith.constant 0 : index
    %25 = vector.load %arg6[%c0_13, %c0_14] : memref<2x32xf32, #tpu.memory_space<vmem>>, vector<2x32xf32>
    tpu.vector_store %arg6[%c0_13, %c0_14], %24 {strides = array<i32>} : memref<2x32xf32, #tpu.memory_space<vmem>>, vector<2x32xf32>,
    %26 = arith.truncf %24 : vector<2x32xf32> to vector<2x32xbf16>
    %c0_15 = arith.constant 0 : index
    %c0_16 = arith.constant 0 : index
    %27 = vector.load %arg5[%c0_15, %c0_16] : memref<32x128xbf16, #tpu.memory_space<vmem>>, vector<32x128xbf16>
    %cst_17 = arith.constant dense<0.000000e+00> : vector<2x128xf32>
    %28 = tpu.matmul %26, %27, %cst_17 {dimension_numbers = #tpu.dot_dimension_numbers<[1], [0], [0], [1], [0, 0, 1, 1], [], []>} : vector<2x32xbf16>, vector<32x128xbf16>, vector<2x128xf32> -> vector<2x128xf32>
    %c0_18 = arith.constant 0 : index
    %c0_19 = arith.constant 0 : index
    %29 = vector.load %arg7[%c0_18, %c0_19] : memref<2x128xf32, #tpu.memory_space<vmem>>, vector<2x128xf32>
    tpu.vector_store %arg7[%c0_18, %c0_19], %28 {strides = array<i32>} : memref<2x128xf32, #tpu.memory_space<vmem>>, vector<2x128xf32>,
    return
  }
  func.func @transform_0(%arg0: i32, %arg1: memref<1xf32, #tpu.memory_space<smem>>) -> (i32, i32, i32) {
    %c0_i32 = arith.constant 0 : i32
    %c0_i32_0 = arith.constant 0 : i32
    %c0_i32_1 = arith.constant 0 : i32
    return %arg0, %c0_i32, %c0_i32_0 : i32, i32, i32
  }
  func.func @transform_1(%arg0: i32, %arg1: memref<1xf32, #tpu.memory_space<smem>>) -> (i32, i32) {
    %c0_i32 = arith.constant 0 : i32
    %c0_i32_0 = arith.constant 0 : i32
    %c0_i32_1 = arith.constant 0 : i32
    return %c0_i32, %c0_i32_0 : i32, i32
  }
  func.func @transform_2(%arg0: i32, %arg1: memref<1xf32, #tpu.memory_space<smem>>) -> (i32, i32) {
    %c0_i32 = arith.constant 0 : i32
    %c0_i32_0 = arith.constant 0 : i32
    %c0_i32_1 = arith.constant 0 : i32
    return %c0_i32, %c0_i32_0 : i32, i32
  }
  func.func @transform_3(%arg0: i32, %arg1: memref<1xf32, #tpu.memory_space<smem>>) -> (i32, i32) {
    %c0_i32 = arith.constant 0 : i32
    %c0_i32_0 = arith.constant 0 : i32
    %c0_i32_1 = arith.constant 0 : i32
    return %c0_i32, %c0_i32_0 : i32, i32
  }
  func.func @transform_4(%arg0: i32, %arg1: memref<1xf32, #tpu.memory_space<smem>>) -> (i32, i32) {
    %c0_i32 = arith.constant 0 : i32
    %c0_i32_0 = arith.constant 0 : i32
    return %arg0, %c0_i32 : i32, i32
  }
  func.func @transform_5(%arg0: i32, %arg1: memref<1xf32, #tpu.memory_space<smem>>) -> (i32, i32) {
    %c0_i32 = arith.constant 0 : i32
    %c0_i32_0 = arith.constant 0 : i32
    return %arg0, %c0_i32 : i32, i32
  }
}

</mosaic_0001>

<llo_original>
// kernel: tpu_custom_call.1
$region0: #{tpu_custom_call.1}
  #allocation0 [shape = 'u32[]', space=smem, size = 0x4, offset = 0x4, fixed_abs, tag = 'smem constant byte address 0x4 - core index']
  #allocation1 [shape = 'u32[144,128]{1,0:T(1,128)}', space=vmem, size = 0x12000, scoped, tag = 'internal scratch']
  #allocation2 [shape = 'f32[2,32]{1,0:T(2,128)}', space=vmem, size = 0x400, scoped, tag = 'scratch operand']
  #allocation3 [shape = 's32[1]{0}', space=sflag, size = 0x4, scoped, tag = 'scoped memory for tpu_custom_call.1']
  #allocation4 [shape = 'f32[1]{0:T(128)S(6)}', space=smem, size = 0x200, scoped, tag = 'prefetched SMEM operand 0']
  %s0 = inlined_call_operand.<no memory space> [shape: f32[1], index: 0, kind: input, shape index: {}]
  %s1 = inlined_call_operand.hbm [shape: f32[2,32,256], index: 1, kind: input, shape index: {}]
  %s2 = inlined_call_operand.vmem [shape: f32[1,32], index: 2, kind: input, shape index: {}]
  %s3 = inlined_call_operand.vmem [shape: f32[1,32], index: 3, kind: input, shape index: {}]
  %s4 = inlined_call_operand.hbm [shape: bf16[32,128], index: 4, kind: input, shape index: {}]
  %s5 = inlined_call_operand.hbm [shape: f32[2,32], index: 5, kind: output, shape index: {0}]
  %s6 = inlined_call_operand.hbm [shape: f32[2,128], index: 6, kind: output, shape index: {1}]
  %7 = xla_tuple %s5, %s6
  %s8 = sld [smem:[#allocation0]]
  $region50: #{tpu_custom_call.1} parent=0
    _
  %s10 = ssub.s32 1, %s8
  %s11 = scalar_select 0, %s10, %s8
  %12 = sst [smem:[#allocation4]] %s0
  $region1: #{tpu_custom_call.1} parent=0
    #allocation5 [shape = 'u8[65536]{0}', space=vmem, size = 0x10000, scoped, tag = 'input window, operand 1, single buffered']
    #allocation6 [shape = 's32[1]{0}', space=sflag, size = 0x4, scoped, tag = 'scoped memory for tpu_custom_call.1']
    #allocation7 [shape = 's32[1]{0}', space=sflag, size = 0x4, scoped, tag = 'scoped memory for tpu_custom_call.1']
    #allocation8 [shape = 'u8[8192]{0}', space=vmem, size = 0x2000, scoped, tag = 'input window, operand 4, single buffered']
    #allocation9 [shape = 's32[1]{0}', space=sflag, size = 0x4, scoped, tag = 'scoped memory for tpu_custom_call.1']
    #allocation10 [shape = 'u8[1024]{0}', space=vmem, size = 0x400, scoped, tag = 'output window, operand 0, single buffered']
    #allocation11 [shape = 'u8[1024]{0}', space=vmem, size = 0x400, scoped, tag = 'output window, operand 1, single buffered']
    #allocation12 [shape = 's32[1]{0}', space=sflag, size = 0x4, scoped, tag = 'scoped memory for tpu_custom_call.1']
    %13 = vsyncpa [#allocation6], 0
    %14 = vsyncpa [#allocation9], 0
    %15 = vsyncpa [#allocation7], 0
    %16 = vsyncpa [#allocation12], 0
    // Predicated region
    $region2: #{tpu_custom_call.1} parent=1 // pred_check
      _
    $region3: #{tpu_custom_call.1} parent=1 // pred_check_branch
      %18 = sbr.rel (0) target = $region5
    $region4: #{tpu_custom_call.1} parent=1 // pred_region
      %s20 = ssub.s32 2048, 2048
      %21 = vsyncadd [#allocation6], %s20
      %s22 = sshll.u32 [#allocation5], 4
      %s23 = int_to_ptr.vmem [resolvable:$true] %s22
      %28 = dma.hbm_to_vmem [thread:$0]  %s1, 2048, %s23, [#allocation6], 256, 256, 16
    $region5: #{tpu_custom_call.1} parent=1 // pred_fallthru
      _
    // Predicated region
    $region6: #{tpu_custom_call.1} parent=1 // pred_check
      _
    $region7: #{tpu_custom_call.1} parent=1 // pred_check_branch
      %30 = sbr.rel (0) target = $region9
    $region8: #{tpu_custom_call.1} parent=1 // pred_region
      _
    $region9: #{tpu_custom_call.1} parent=1 // pred_fallthru
      _
    // Predicated region
    $region10: #{tpu_custom_call.1} parent=1 // pred_check
      _
    $region11: #{tpu_custom_call.1} parent=1 // pred_check_branch
      %32 = sbr.rel (0) target = $region13
    $region12: #{tpu_custom_call.1} parent=1 // pred_region
      _
    $region13: #{tpu_custom_call.1} parent=1 // pred_fallthru
      _
    // Predicated region
    $region14: #{tpu_custom_call.1} parent=1 // pred_check
      _
    $region15: #{tpu_custom_call.1} parent=1 // pred_check_branch
      %34 = sbr.rel (0) target = $region17
    $region16: #{tpu_custom_call.1} parent=1 // pred_region
      %s36 = ssub.s32 256, 256
      %37 = vsyncadd [#allocation9], %s36
      %s38 = sshll.u32 [#allocation8], 4
      %s39 = int_to_ptr.vmem [resolvable:$true] %s38
      %44 = dma.hbm_to_vmem [thread:$0]  %s4, 256, %s39, [#allocation9], 64, 64, 4
    $region17: #{tpu_custom_call.1} parent=1 // pred_fallthru
      _
    // Predicated region
    $region18: #{tpu_custom_call.1} parent=1 // pred_check
      _
    $region19: #{tpu_custom_call.1} parent=1 // pred_check_branch
      %46 = sbr.rel (0) target = $region21
    $region20: #{tpu_custom_call.1} parent=1 // pred_region
      %47 = dma.done [#allocation6], 2048
    $region21: #{tpu_custom_call.1} parent=1 // pred_fallthru
      _
    // Predicated region
    $region22: #{tpu_custom_call.1} parent=1 // pred_check
      _
    $region23: #{tpu_custom_call.1} parent=1 // pred_check_branch
      %49 = sbr.rel (0) target = $region25
    $region24: #{tpu_custom_call.1} parent=1 // pred_region
      %50 = dma.done [#allocation9], 256
    $region25: #{tpu_custom_call.1} parent=1 // pred_fallthru
      _
    %s52 = sld [smem:[#allocation4]]
    %vm53 = vcmask 254976
    %54 = vst.msk [vmem:[#allocation2] sm:$0x3] %vm53, 0.0
    %s55 = ssub.f32 %s52, 3.0
    %s56 = sand.u32 2147483647, %s55
    %p57 = scmp.lt.f32.partialorder %s56, 1e-06
    // Predicated region
    $region26: #{tpu_custom_call.1} parent=1 // pred_check
      %p58 = pneg %p57
    $region27: #{tpu_custom_call.1} parent=1 // pred_check_branch
      %60 = sbr.rel (%p58) target = $region29
    $region28: #{tpu_custom_call.1} parent=1 // pred_region
      %v61 = vld [vmem:[#allocation5] sm:$0xff]
      %v62 = vld [vmem:[#allocation5 + $0x8] sm:$0xff]
      %v63 = vld [vmem:[#allocation5 + $0x10] sm:$0xff]
      %v64 = vld [vmem:[#allocation5 + $0x18] sm:$0xff]
      %v65 = vld [vmem:[#allocation5 + $0x20] sm:$0xff]
      %v66 = vld [vmem:[#allocation5 + $0x28] sm:$0xff]
      %v67 = vld [vmem:[#allocation5 + $0x30] sm:$0xff]
      %v68 = vld [vmem:[#allocation5 + $0x38] sm:$0xff]
      %v69 = vld [vmem:[#allocation5 + $0x40] sm:$0xff]
      %v70 = vld [vmem:[#allocation5 + $0x48] sm:$0xff]
      %v71 = vld [vmem:[#allocation5 + $0x50] sm:$0xff]
      %v72 = vld [vmem:[#allocation5 + $0x58] sm:$0xff]
      %v73 = vld [vmem:[#allocation5 + $0x60] sm:$0xff]
      %v74 = vld [vmem:[#allocation5 + $0x68] sm:$0xff]
      %v75 = vld [vmem:[#allocation5 + $0x70] sm:$0xff]
      %v76 = vld [vmem:[#allocation5 + $0x78] sm:$0xff]
      %v77 = vmax.f32 %v61, 1e-06
      %v78 = vmax.f32 %v62, 1e-06
      %v79 = vmax.f32 %v63, 1e-06
      %v80 = vmax.f32 %v64, 1e-06
      %v81 = vmax.f32 %v65, 1e-06
      %v82 = vmax.f32 %v66, 1e-06
      %v83 = vmax.f32 %v67, 1e-06
      %v84 = vmax.f32 %v68, 1e-06
      %v85 = vmax.f32 %v69, 1e-06
      %v86 = vmax.f32 %v70, 1e-06
      %v87 = vmax.f32 %v71, 1e-06
      %v88 = vmax.f32 %v72, 1e-06
      %v89 = vmax.f32 %v73, 1e-06
      %v90 = vmax.f32 %v74, 1e-06
      %v91 = vmax.f32 %v75, 1e-06
      %v92 = vmax.f32 %v76, 1e-06
      %v93 = vld [vmem:[#allocation2] sm:$0x3]
      %v94 = vmul.f32 %v77, %v77
      %v95 = vmul.f32 %v78, %v78
      %v96 = vmul.f32 %v79, %v79
      %v97 = vmul.f32 %v80, %v80
      %v98 = vmul.f32 %v81, %v81
      %v99 = vmul.f32 %v82, %v82
      %v100 = vmul.f32 %v83, %v83
      %v101 = vmul.f32 %v84, %v84
      %v102 = vmul.f32 %v85, %v85
      %v103 = vmul.f32 %v86, %v86
      %v104 = vmul.f32 %v87, %v87
      %v105 = vmul.f32 %v88, %v88
      %v106 = vmul.f32 %v89, %v89
      %v107 = vmul.f32 %v90, %v90
      %v108 = vmul.f32 %v91, %v91
      %v109 = vmul.f32 %v92, %v92
      %v110 = vmul.f32 %v94, %v77
      %v111 = vmul.f32 %v95, %v78
      %v112 = vmul.f32 %v96, %v79
      %v113 = vmul.f32 %v97, %v80
      %v114 = vmul.f32 %v98, %v81
      %v115 = vmul.f32 %v99, %v82
      %v116 = vmul.f32 %v100, %v83
      %v117 = vmul.f32 %v101, %v84
      %v118 = vmul.f32 %v102, %v85
      %v119 = vmul.f32 %v103, %v86
      %v120 = vmul.f32 %v104, %v87
      %v121 = vmul.f32 %v105, %v88
      %v122 = vmul.f32 %v106, %v89
      %v123 = vmul.f32 %v107, %v90
      %v124 = vmul.f32 %v108, %v91
      %v125 = vmul.f32 %v109, %v92
      %v126 = vadd.f32 %v110, %v111
      %127 = vadd.xlane.f32.xlu0 %v126
      %v128 = vpop.xlane.xlu0 %127
      %v129 = vadd.f32 %v112, %v113
      %130 = vadd.xlane.f32.xlu0 %v129
      %v131 = vpop.xlane.xlu0 %130
      %v132 = vadd.f32 %v114, %v115
      %133 = vadd.xlane.f32.xlu0 %v132
      %v134 = vpop.xlane.xlu0 %133
      %v135 = vadd.f32 %v116, %v117
      %136 = vadd.xlane.f32.xlu0 %v135
      %v137 = vpop.xlane.xlu0 %136
      %v138 = vadd.f32 %v118, %v119
      %139 = vadd.xlane.f32.xlu0 %v138
      %v140 = vpop.xlane.xlu0 %139
      %v141 = vadd.f32 %v120, %v121
      %142 = vadd.xlane.f32.xlu0 %v141
      %v143 = vpop.xlane.xlu0 %142
      %v144 = vadd.f32 %v122, %v123
      %145 = vadd.xlane.f32.xlu0 %v144
      %v146 = vpop.xlane.xlu0 %145
      %v147 = vadd.f32 %v124, %v125
      %148 = vadd.xlane.f32.xlu0 %v147
      %v149 = vpop.xlane.xlu0 %148
      %v158 = vlaneseq
      %v159 = vand.u32 %v158, 127
      %v160 = vlaneseq
      %v161 = vshrl.u32 %v160, 7
      %v162 = vsub.s32 %v159, %v161
      %v163 = vrot.slane %v128, %v162
      %v164 = vadd.s32 %v159, 4294967288
      %v165 = vlaneseq
      %v166 = vshrl.u32 %v165, 7
      %v167 = vsub.s32 %v164, %v166
      %v168 = vrot.slane %v131, %v167
      %vm169 = vcmask 130112
      %v170 = vsel %vm169, %v168, %v163
      %v171 = vadd.s32 %v159, 4294967280
      %v172 = vlaneseq
      %v173 = vshrl.u32 %v172, 7
      %v174 = vsub.s32 %v171, %v173
      %v175 = vrot.slane %v134, %v174
      %vm176 = vcmask 195712
      %v177 = vsel %vm176, %v175, %v170
      %v178 = vadd.s32 %v159, 4294967272
      %v179 = vlaneseq
      %v180 = vshrl.u32 %v179, 7
      %v181 = vsub.s32 %v178, %v180
      %v182 = vrot.slane %v137, %v181
      %vm183 = vcmask 261312
      %v184 = vsel %vm183, %v182, %v177
      %v185 = vlaneseq
      %v186 = vshrl.u32 %v185, 7
      %v187 = vsub.s32 %v159, %v186
      %v188 = vrot.slane %v140, %v187
      %v189 = vlaneseq
      %v190 = vshrl.u32 %v189, 7
      %v191 = vsub.s32 %v164, %v190
      %v192 = vrot.slane %v143, %v191
      %v193 = vsel %vm169, %v192, %v188
      %v194 = vlaneseq
      %v195 = vshrl.u32 %v194, 7
      %v196 = vsub.s32 %v171, %v195
      %v197 = vrot.slane %v146, %v196
      %v198 = vsel %vm176, %v197, %v193
      %v199 = vlaneseq
      %v200 = vshrl.u32 %v199, 7
      %v201 = vsub.s32 %v178, %v200
      %v202 = vrot.slane %v149, %v201
      %v203 = vsel %vm183, %v202, %v198
      %vm204 = vcmask 1041409
      %v205 = vsel %vm204, %v203, %v184
      %v207 = vadd.f32 %v93, %v205
      %208 = vst.msk [vmem:[#allocation2] sm:$0x3] %vm53, %v207
    $region29: #{tpu_custom_call.1} parent=1 // pred_fallthru
      _
    %p209 = pneg %p57
    // Predicated region
    $region30: #{tpu_custom_call.1} parent=1 // pred_check
      _
    $region31: #{tpu_custom_call.1} parent=1 // pred_check_branch
      %211 = sbr.rel (%p57) target = $region33
    $region32: #{tpu_custom_call.1} parent=1 // pred_region
      %v212 = vld [vmem:[#allocation5] sm:$0xff]
      %v213 = vld [vmem:[#allocation5 + $0x8] sm:$0xff]
      %v214 = vld [vmem:[#allocation5 + $0x10] sm:$0xff]
      %v215 = vld [vmem:[#allocation5 + $0x18] sm:$0xff]
      %v216 = vld [vmem:[#allocation5 + $0x20] sm:$0xff]
      %v217 = vld [vmem:[#allocation5 + $0x28] sm:$0xff]
      %v218 = vld [vmem:[#allocation5 + $0x30] sm:$0xff]
      %v219 = vld [vmem:[#allocation5 + $0x38] sm:$0xff]
      %v220 = vld [vmem:[#allocation5 + $0x40] sm:$0xff]
      %v221 = vld [vmem:[#allocation5 + $0x48] sm:$0xff]
      %v222 = vld [vmem:[#allocation5 + $0x50] sm:$0xff]
      %v223 = vld [vmem:[#allocation5 + $0x58] sm:$0xff]
      %v224 = vld [vmem:[#allocation5 + $0x60] sm:$0xff]
      %v225 = vld [vmem:[#allocation5 + $0x68] sm:$0xff]
      %v226 = vld [vmem:[#allocation5 + $0x70] sm:$0xff]
      %v227 = vld [vmem:[#allocation5 + $0x78] sm:$0xff]
      %v228 = vmax.f32 %v212, 1e-06
      %v229 = vmax.f32 %v213, 1e-06
      %v230 = vmax.f32 %v214, 1e-06
      %v231 = vmax.f32 %v215, 1e-06
      %v232 = vmax.f32 %v216, 1e-06
      %v233 = vmax.f32 %v217, 1e-06
      %v234 = vmax.f32 %v218, 1e-06
      %v235 = vmax.f32 %v219, 1e-06
      %v236 = vmax.f32 %v220, 1e-06
      %v237 = vmax.f32 %v221, 1e-06
      %v238 = vmax.f32 %v222, 1e-06
      %v239 = vmax.f32 %v223, 1e-06
      %v240 = vmax.f32 %v224, 1e-06
      %v241 = vmax.f32 %v225, 1e-06
      %v242 = vmax.f32 %v226, 1e-06
      %v243 = vmax.f32 %v227, 1e-06
      %v244 = vld [vmem:[#allocation2] sm:$0x3]
      %v245 = vlog2.pop %v228
      %v246 = vmul.f32 %v245, 0.6931472
      %v247 = vlog2.pop %v229
      %v248 = vmul.f32 %v247, 0.6931472
      %v249 = vlog2.pop %v230
      %v250 = vmul.f32 %v249, 0.6931472
      %v251 = vlog2.pop %v231
      %v252 = vmul.f32 %v251, 0.6931472
      %v253 = vlog2.pop %v232
      %v254 = vmul.f32 %v253, 0.6931472
      %v255 = vlog2.pop %v233
      %v256 = vmul.f32 %v255, 0.6931472
      %v257 = vlog2.pop %v234
      %v258 = vmul.f32 %v257, 0.6931472
      %v259 = vlog2.pop %v235
      %v260 = vmul.f32 %v259, 0.6931472
      %v261 = vlog2.pop %v236
      %v262 = vmul.f32 %v261, 0.6931472
      %v263 = vlog2.pop %v237
      %v264 = vmul.f32 %v263, 0.6931472
      %v265 = vlog2.pop %v238
      %v266 = vmul.f32 %v265, 0.6931472
      %v267 = vlog2.pop %v239
      %v268 = vmul.f32 %v267, 0.6931472
      %v269 = vlog2.pop %v240
      %v270 = vmul.f32 %v269, 0.6931472
      %v271 = vlog2.pop %v241
      %v272 = vmul.f32 %v271, 0.6931472
      %v273 = vlog2.pop %v242
      %v274 = vmul.f32 %v273, 0.6931472
      %v275 = vlog2.pop %v243
      %v276 = vmul.f32 %v275, 0.6931472
      %v277 = vstv %s52
      %v278 = vmul.f32 %v277, %v246
      %v279 = vmul.f32 %v277, %v248
      %v280 = vmul.f32 %v277, %v250
      %v281 = vmul.f32 %v277, %v252
      %v282 = vmul.f32 %v277, %v254
      %v283 = vmul.f32 %v277, %v256
      %v284 = vmul.f32 %v277, %v258
      %v285 = vmul.f32 %v277, %v260
      %v286 = vmul.f32 %v277, %v262
      %v287 = vmul.f32 %v277, %v264
      %v288 = vmul.f32 %v277, %v266
      %v289 = vmul.f32 %v277, %v268
      %v290 = vmul.f32 %v277, %v270
      %v291 = vmul.f32 %v277, %v272
      %v292 = vmul.f32 %v277, %v274
      %v293 = vmul.f32 %v277, %v276
      %v294 = vmul.f32 %v278, 1.442695
      %v295 = vpow.pop %v294
      %v296 = vmul.f32 %v279, 1.442695
      %v297 = vpow.pop %v296
      %v298 = vmul.f32 %v280, 1.442695
      %v299 = vpow.pop %v298
      %v300 = vmul.f32 %v281, 1.442695
      %v301 = vpow.pop %v300
      %v302 = vmul.f32 %v282, 1.442695
      %v303 = vpow.pop %v302
      %v304 = vmul.f32 %v283, 1.442695
      %v305 = vpow.pop %v304
      %v306 = vmul.f32 %v284, 1.442695
      %v307 = vpow.pop %v306
      %v308 = vmul.f32 %v285, 1.442695
      %v309 = vpow.pop %v308
      %v310 = vmul.f32 %v286, 1.442695
      %v311 = vpow.pop %v310
      %v312 = vmul.f32 %v287, 1.442695
      %v313 = vpow.pop %v312
      %v314 = vmul.f32 %v288, 1.442695
      %v315 = vpow.pop %v314
      %v316 = vmul.f32 %v289, 1.442695
      %v317 = vpow.pop %v316
      %v318 = vmul.f32 %v290, 1.442695
      %v319 = vpow.pop %v318
      %v320 = vmul.f32 %v291, 1.442695
      %v321 = vpow.pop %v320
      %v322 = vmul.f32 %v292, 1.442695
      %v323 = vpow.pop %v322
      %v324 = vmul.f32 %v293, 1.442695
      %v325 = vpow.pop %v324
      %v326 = vadd.f32 %v295, %v297
      %327 = vadd.xlane.f32.xlu0 %v326
      %v328 = vpop.xlane.xlu0 %327
      %v329 = vadd.f32 %v299, %v301
      %330 = vadd.xlane.f32.xlu0 %v329
      %v331 = vpop.xlane.xlu0 %330
      %v332 = vadd.f32 %v303, %v305
      %333 = vadd.xlane.f32.xlu0 %v332
      %v334 = vpop.xlane.xlu0 %333
      %v335 = vadd.f32 %v307, %v309
      %336 = vadd.xlane.f32.xlu0 %v335
      %v337 = vpop.xlane.xlu0 %336
      %v338 = vadd.f32 %v311, %v313
      %339 = vadd.xlane.f32.xlu0 %v338
      %v340 = vpop.xlane.xlu0 %339
      %v341 = vadd.f32 %v315, %v317
      %342 = vadd.xlane.f32.xlu0 %v341
      %v343 = vpop.xlane.xlu0 %342
      %v344 = vadd.f32 %v319, %v321
      %345 = vadd.xlane.f32.xlu0 %v344
      %v346 = vpop.xlane.xlu0 %345
      %v347 = vadd.f32 %v323, %v325
      %348 = vadd.xlane.f32.xlu0 %v347
      %v349 = vpop.xlane.xlu0 %348
      %v358 = vlaneseq
      %v359 = vand.u32 %v358, 127
      %v360 = vlaneseq
      %v361 = vshrl.u32 %v360, 7
      %v362 = vsub.s32 %v359, %v361
      %v363 = vrot.slane %v328, %v362
      %v364 = vadd.s32 %v359, 4294967288
      %v365 = vlaneseq
      %v366 = vshrl.u32 %v365, 7
      %v367 = vsub.s32 %v364, %v366
      %v368 = vrot.slane %v331, %v367
      %vm369 = vcmask 130112
      %v370 = vsel %vm369, %v368, %v363
      %v371 = vadd.s32 %v359, 4294967280
      %v372 = vlaneseq
      %v373 = vshrl.u32 %v372, 7
      %v374 = vsub.s32 %v371, %v373
      %v375 = vrot.slane %v334, %v374
      %vm376 = vcmask 195712
      %v377 = vsel %vm376, %v375, %v370
      %v378 = vadd.s32 %v359, 4294967272
      %v379 = vlaneseq
      %v380 = vshrl.u32 %v379, 7
      %v381 = vsub.s32 %v378, %v380
      %v382 = vrot.slane %v337, %v381
      %vm383 = vcmask 261312
      %v384 = vsel %vm383, %v382, %v377
      %v385 = vlaneseq
      %v386 = vshrl.u32 %v385, 7
      %v387 = vsub.s32 %v359, %v386
      %v388 = vrot.slane %v340, %v387
      %v389 = vlaneseq
      %v390 = vshrl.u32 %v389, 7
      %v391 = vsub.s32 %v364, %v390
      %v392 = vrot.slane %v343, %v391
      %v393 = vsel %vm369, %v392, %v388
      %v394 = vlaneseq
      %v395 = vshrl.u32 %v394, 7
      %v396 = vsub.s32 %v371, %v395
      %v397 = vrot.slane %v346, %v396
      %v398 = vsel %vm376, %v397, %v393
      %v399 = vlaneseq
      %v400 = vshrl.u32 %v399, 7
      %v401 = vsub.s32 %v378, %v400
      %v402 = vrot.slane %v349, %v401
      %v403 = vsel %vm383, %v402, %v398
      %vm404 = vcmask 1041409
      %v405 = vsel %vm404, %v403, %v384
      %v407 = vadd.f32 %v244, %v405
      %408 = vst.msk [vmem:[#allocation2] sm:$0x3] %vm53, %v407
    $region33: #{tpu_custom_call.1} parent=1 // pred_fallthru
      _
    %v409 = vld [vmem:[#allocation2] sm:$0x3]
    %v410 = vmul.f32 %v409, 0.00390625
    %v411 = vlog2.pop %v410
    %v412 = vmul.f32 %v411, 0.6931472
    %v413 = vstv %s52
    %v414 = vrcp.pop %v413
    %s415 = vtos %v414
    %v416 = vstv %s415
    %v417 = vmul.f32 %v412, %v416
    %v418 = vmul.f32 %v417, 1.442695
    %v419 = vpow.pop %v418
    %v420 = vld [vmem:[%s2] sm:$0x1]
    %v422 = vlaneseq
    %v423 = vshrl.u32 %v422, 7
    %v424 = vsub.s32 0, %v423
    %v425 = vrot.slane %v420, %v424
    %v427 = vmul.f32 %v419, %v425
    %v428 = vld [vmem:[%s3] sm:$0x1]
    %v430 = vlaneseq
    %v431 = vshrl.u32 %v430, 7
    %v432 = vsub.s32 0, %v431
    %v433 = vrot.slane %v428, %v432
    %v435 = vadd.f32 %v427, %v433
    %436 = vst.msk [vmem:[#allocation10] sm:$0x3] %vm53, %v435
    %v437 = vpack.c.bf16 %v435, %v435
    %v438 = vld [vmem:[#allocation8] sm:$0xf]
    %v439 = vld [vmem:[#allocation8 + $0x4] sm:$0xf]
    %v440 = vld [vmem:[#allocation8 + $0x8] sm:$0xf]
    %v441 = vld [vmem:[#allocation8 + $0xc] sm:$0xf]
    %v446 = vunpack.c.l.b16 %v438
    %v447 = vunpack.c.l.b16 %v439
    %v448 = vunpack.c.l.b16 %v440
    %v449 = vunpack.c.l.b16 %v441
    %v450 = vpack.c.b16 %v447, %v446
    %v451 = vpack.c.b16 %v449, %v448
    %vm454 = vcmask 261120
    %v456 = vsel %vm454, %v437, 0
    %458 = vmatprep.subr.bf16.mxu0 0
    %459 = vmatpush1.bf16.msra.mxu0 0
    %460 = vmatprep.subr.bf16.mxu0 0
    %461 = vmatpush1.bf16.msra.mxu0 0
    %462 = vmatprep.subr.bf16.mxu0 0
    %463 = vmatpush1.bf16.msra.mxu0 0
    %464 = vmatprep.subr.bf16.mxu0 0
    %465 = vmatpush1.bf16.msra.mxu0 0
    %466 = vmatprep.subr.bf16.mxu0 0
    %467 = vmatpush1.bf16.msra.mxu0 0
    %468 = vmatprep.subr.bf16.mxu0 0
    %469 = vmatpush1.bf16.msra.mxu0 0
    %470 = vmatprep.subr.bf16.mxu0 0
    %471 = vmatpush1.bf16.msra.mxu0 %v451
    %472 = vmatprep.subr.bf16.mxu0 0
    %473 = vmatpush1.bf16.msra.mxu0 %v450
    %474 = vmatprep.subr.bf16.mxu0 0
    %475 = vmatpush2.bf16.msra.mxu0 0
    %476 = vmatprep.subr.bf16.mxu0 0
    %477 = vmatpush2.bf16.msra.mxu0 0
    %478 = vmatprep.subr.bf16.mxu0 0
    %479 = vmatpush2.bf16.msra.mxu0 0
    %480 = vmatprep.subr.bf16.mxu0 0
    %481 = vmatpush2.bf16.msra.mxu0 0
    %482 = vmatprep.subr.bf16.mxu0 0
    %483 = vmatpush2.bf16.msra.mxu0 0
    %484 = vmatprep.subr.bf16.mxu0 0
    %485 = vmatpush2.bf16.msra.mxu0 0
    %486 = vmatprep.subr.bf16.mxu0 0
    %487 = vmatpush2.bf16.msra.mxu0 0
    %488 = vmatprep.subr.bf16.mxu0 0
    %489 = vmatpush2.bf16.msra.mxu0 0
    %490 = vmatprep.mubr.bf16.mxu0 0
    %491 = vmatmul.mubr.bf16.gmra.mxu0 %v456
    %v492 = vpop.f32.mrf.mxu0
    %v493 = vadd.f32 0.0, %v492
    %v494 = vpop.f32.mrf.mxu0
    %v495 = vpop.f32.mrf.mxu0
    %v496 = vpop.f32.mrf.mxu0
    %497 = vdwg.mxu0
    %498 = vst [vmem:[#allocation11] sm:$0x3] %v493
    // Predicated region
    $region34: #{tpu_custom_call.1} parent=1 // pred_check
      _
    $region35: #{tpu_custom_call.1} parent=1 // pred_check_branch
      %500 = sbr.rel (0) target = $region37
    $region36: #{tpu_custom_call.1} parent=1 // pred_region
      %s502 = ssub.s32 32, 32
      %503 = vsyncadd [#allocation7], %s502
      %s505 = sshll.u32 [#allocation10], 4
      %s506 = int_to_ptr.vmem [resolvable:$true] %s505
      %508 = dma.vmem_to_hbm [thread:$0]  %s506, 32, %s5, [#allocation7]
    $region37: #{tpu_custom_call.1} parent=1 // pred_fallthru
      _
    // Predicated region
    $region38: #{tpu_custom_call.1} parent=1 // pred_check
      _
    $region39: #{tpu_custom_call.1} parent=1 // pred_check_branch
      %510 = sbr.rel (0) target = $region41
    $region40: #{tpu_custom_call.1} parent=1 // pred_region
      %s512 = ssub.s32 32, 32
      %513 = vsyncadd [#allocation12], %s512
      %s515 = sshll.u32 [#allocation11], 4
      %s516 = int_to_ptr.vmem [resolvable:$true] %s515
      %518 = dma.vmem_to_hbm [thread:$0]  %s516, 32, %s6, [#allocation12]
    $region41: #{tpu_custom_call.1} parent=1 // pred_fallthru
      _
    // Predicated region
    $region42: #{tpu_custom_call.1} parent=1 // pred_check
      _
    $region43: #{tpu_custom_call.1} parent=1 // pred_check_branch
      %520 = sbr.rel (0) target = $region45
    $region44: #{tpu_custom_call.1} parent=1 // pred_region
      %521 = dma.done [#allocation7], 32
    $region45: #{tpu_custom_call.1} parent=1 // pred_fallthru
      _
    // Predicated region
    $region46: #{tpu_custom_call.1} parent=1 // pred_check
      _
    $region47: #{tpu_custom_call.1} parent=1 // pred_check_branch
      %523 = sbr.rel (0) target = $region49
    $region48: #{tpu_custom_call.1} parent=1 // pred_region
      %524 = dma.done [#allocation12], 32
    $region49: #{tpu_custom_call.1} parent=1 // pred_fallthru
      _
    %525 = vsyncpa [#allocation6], 1
    %526 = vsyncpa [#allocation9], 1
    %527 = vsyncpa [#allocation7], 1
    %528 = vsyncpa [#allocation12], 1

</llo_original>
